<compile_context>
chip_gen: v7x
topology: tpu7x:2x2x1
jax: 0.10.0
libtpu: 0.0.40
codegen_flags: <defaults>
</compile_context>

<pallas_src>
import functools

import jax
import jax.numpy as jnp
from jax.experimental import pallas as pl
from jax.experimental.pallas import tpu as pltpu

_EPS = 1e-8                                   # torch.nn.PoissonNLLLoss default eps
_HALF_LOG_2PI = 0.5 * float(jnp.log(2.0 * jnp.pi))
_TARGET_BLOCK_BYTES = 2 * 1024 * 1024         # ~2 MiB per-input block (roofline sweet spot)


def _poisson_match_kernel(x_ref, t_ref, o_ref, acc_ref, *,
                          scale, n_valid, tn, needs_mask):
    k = pl.program_id(1)

    @pl.when(k == 0)
    def _init():
        acc_ref[...] = jnp.zeros_like(acc_ref)

    # All arithmetic in f32 (v5e has no bf16 VPU/EUP path; f32 accumulation).
    H = jnp.maximum(x_ref[...].astype(jnp.float32), 0.01)
    O = jnp.maximum(t_ref[...].astype(jnp.float32), 0.01)

    log_O = jnp.log(O)
    # Poisson NLL, log_input=False.
    nll = H - O * jnp.log(H + _EPS)
    # full=True Stirling term, folded:
    #   O*log(O) - O + 0.5*log(2*pi*O) = (O + 0.5)*log(O) - O + 0.5*log(2*pi)
    stirling = (O + 0.5) * log_O - O + _HALF_LOG_2PI
    nll = nll + jnp.where(O > 1.0, stirling, 0.0)
    loss = nll - 0.5 * jnp.log(H)

    if needs_mask:
        # Zero out padded columns of the partial last column block.
        col_ids = k * tn + jax.lax.broadcasted_iota(jnp.int32, loss.shape, 1)
        loss = jnp.where(col_ids < n_valid, loss, 0.0)

    acc_ref[...] += jnp.sum(loss, axis=-1, keepdims=True)

    @pl.when(k == pl.num_programs(1) - 1)
    def _finalize():
        # scale = weight / N applied once per row (hoisted out of hot path).
        o_ref[...] = (acc_ref[...] * scale).astype(o_ref.dtype)


def _choose_tiles(B, N, itemsize, target_bytes=_TARGET_BLOCK_BYTES):
    """Pick (TB, TN): TB multiple of 8 (or == B), TN multiple of 128 (or == N)."""
    row_bytes = N * itemsize
    if row_bytes * 8 <= target_bytes:
        # Whole rows fit: tile the batch dimension only.
        tb = max(8, ((target_bytes // row_bytes) // 8) * 8)
        tb = B if B <= tb else tb
        return tb, N
    # Rows too wide: keep 8 rows, tile the reduction axis in lane multiples.
    tn = max(128, ((target_bytes // (8 * itemsize)) // 128) * 128)
    tn = N if N <= tn else tn
    tb = B if B <= 8 else 8
    return tb, tn


def poisson_match_loss(inp, target, weight=1.0, axis=-1, *,
                       block_rows=None, block_cols=None):
    """Pallas TPU implementation of PoissonMatchLoss.forward (axis must be last)."""
    assert inp.shape == target.shape
    assert inp.ndim == 2
    assert axis in (-1, inp.ndim - 1), "kernel reduces over the last axis"
    # weight must be a Python scalar (baked in at trace time).
    assert isinstance(weight, (int, float)), "weight must be a Python scalar"
    B, N = inp.shape

    tb, tn = _choose_tiles(B, N, jnp.dtype(inp.dtype).itemsize)
    if block_rows is not None:
        tb = block_rows
    if block_cols is not None:
        tn = block_cols
    grid = (pl.cdiv(B, tb), pl.cdiv(N, tn))
    needs_mask = (N % tn) != 0

    kernel = functools.partial(
        _poisson_match_kernel,
        scale=float(weight) / float(N),
        n_valid=N,
        tn=tn,
        needs_mask=needs_mask,
    )

    out = pl.pallas_call(
        kernel,
        out_shape=jax.ShapeDtypeStruct((B, 1), inp.dtype),
        grid_spec=pltpu.PrefetchScalarGridSpec(
            num_scalar_prefetch=0,
            grid=grid,
            in_specs=[
                pl.BlockSpec((tb, tn), lambda i, k: (i, k)),
                pl.BlockSpec((tb, tn), lambda i, k: (i, k)),
            ],
            out_specs=pl.BlockSpec((tb, 1), lambda i, k: (i, 0)),
            scratch_shapes=[pltpu.VMEM((tb, 1), jnp.float32)],
        ),
        compiler_params=pltpu.CompilerParams(
            # Batch axis parallel (megacore on v7x); reduction axis last, arbitrary.
            dimension_semantics=("parallel", "arbitrary"),
        ),
    )(inp, target)
    return out[:, 0]


def _reference(inp, target, weight=1.0):
    # Pure-JAX reference mirroring the PyTorch module exactly, for validation.
    H = jnp.maximum(inp.astype(jnp.float32), 0.01)
    O = jnp.maximum(target.astype(jnp.float32), 0.01)
    nll = H - O * jnp.log(H + _EPS)
    stirling = O * jnp.log(O) - O + 0.5 * jnp.log(2.0 * jnp.pi * O)
    nll = nll + jnp.where(O > 1.0, stirling, 0.0)
    loss = nll - jnp.log(H) / 2.0
    return jnp.mean(weight * loss, axis=-1)


if __name__ == "__main__":
    key = jax.random.PRNGKey(0)

    # --- Test 1: small shapes, single block (B=8 hypotheses, N=128 PMT bins).
    k1, k2 = jax.random.split(key)
    B, N = 8, 128
    x = jax.random.uniform(k1, (B, N), jnp.float32, minval=-0.5, maxval=5.0)
    t = jax.random.uniform(k2, (B, N), jnp.float32, minval=-0.5, maxval=5.0)

    out = poisson_match_loss(x, t, weight=1.0, axis=-1)
    out = jax.block_until_ready(out)
    ref = _reference(x, t, weight=1.0)
    assert out.shape == (B,)
    assert jnp.allclose(out, ref, rtol=1e-5, atol=1e-5), (out, ref)

    # --- Test 2: forced multi-block grid (exercises batch tiling, the N-axis
    # accumulator, partial row block and masked partial column block).
    k3, k4 = jax.random.split(k2)
    B2, N2 = 24, 320
    x2 = jax.random.uniform(k3, (B2, N2), jnp.float32, minval=-0.5, maxval=5.0)
    t2 = jax.random.uniform(k4, (B2, N2), jnp.float32, minval=-0.5, maxval=5.0)

    out2 = poisson_match_loss(x2, t2, weight=0.5, axis=-1,
                              block_rows=16, block_cols=128)
    out2 = jax.block_until_ready(out2)
    ref2 = _reference(x2, t2, weight=0.5)
    assert out2.shape == (B2,)
    assert jnp.allclose(out2, ref2, rtol=1e-5, atol=1e-5), (out2, ref2)

    print("KERNEL_OK")
</pallas_src>

<mosaic_0001>
module attributes {stable_mosaic.version = 11 : i64} {
  func.func @_poisson_match_kernel(%arg0: i32, %arg1: i32, %arg2: memref<8x128xf32, #tpu.memory_space<vmem>>, %arg3: memref<8x128xf32, #tpu.memory_space<vmem>>, %arg4: memref<8x1xf32, #tpu.memory_space<vmem>>, %arg5: memref<8x1xf32, #tpu.memory_space<vmem>>) attributes {dimension_semantics = [#tpu.dimension_semantics<parallel>, #tpu.dimension_semantics<arbitrary>], iteration_bounds = array<i64: 1, 1>, scalar_prefetch = 0 : i64, scratch_operands = 1 : i64, tpu.core_type = #tpu.core_type<tc>, window_params = [{transform_indices = @transform_0, window_bounds = array<i64: 8, 128>}, {transform_indices = @transform_1, window_bounds = array<i64: 8, 128>}, {transform_indices = @transform_2, window_bounds = array<i64: 8, 1>}]} {
    %c0_i32 = arith.constant 0 : i32
    %0 = arith.cmpi eq, %arg1, %c0_i32 : i32
    %1 = arith.extui %0 : i1 to i32
    %c0_i32_0 = arith.constant 0 : i32
    %2 = arith.cmpi ne, %1, %c0_i32_0 : i32
    scf.if %2 {
      %cst_18 = arith.constant 0.000000e+00 : f32
      %38 = vector.broadcast %cst_18 : f32 to vector<8x1xf32>
      %c0_19 = arith.constant 0 : index
      %c0_20 = arith.constant 0 : index
      %39 = vector.load %arg5[%c0_19, %c0_20] : memref<8x1xf32, #tpu.memory_space<vmem>>, vector<8x1xf32>
      tpu.vector_store %arg5[%c0_19, %c0_20], %38 {strides = array<i32>} : memref<8x1xf32, #tpu.memory_space<vmem>>, vector<8x1xf32>,
    } else {
    }
    %c0 = arith.constant 0 : index
    %c0_1 = arith.constant 0 : index
    %3 = vector.load %arg2[%c0, %c0_1] : memref<8x128xf32, #tpu.memory_space<vmem>>, vector<8x128xf32>
    %cst = arith.constant 0.00999999977 : f32
    %4 = vector.broadcast %cst : f32 to vector<8x128xf32>
    %5 = arith.maximumf %3, %4 : vector<8x128xf32>
    %c0_2 = arith.constant 0 : index
    %c0_3 = arith.constant 0 : index
    %6 = vector.load %arg3[%c0_2, %c0_3] : memref<8x128xf32, #tpu.memory_space<vmem>>, vector<8x128xf32>
    %cst_4 = arith.constant 0.00999999977 : f32
    %7 = vector.broadcast %cst_4 : f32 to vector<8x128xf32>
    %8 = arith.maximumf %6, %7 : vector<8x128xf32>
    %9 = math.log %8 : vector<8x128xf32>
    %cst_5 = arith.constant 9.99999993E-9 : f32
    %10 = vector.broadcast %cst_5 : f32 to vector<8x128xf32>
    %11 = arith.addf %5, %10 : vector<8x128xf32>
    %12 = math.log %11 : vector<8x128xf32>
    %13 = arith.mulf %8, %12 : vector<8x128xf32>
    %14 = arith.subf %5, %13 : vector<8x128xf32>
    %cst_6 = arith.constant 5.000000e-01 : f32
    %15 = vector.broadcast %cst_6 : f32 to vector<8x128xf32>
    %16 = arith.addf %8, %15 : vector<8x128xf32>
    %17 = arith.mulf %16, %9 : vector<8x128xf32>
    %18 = arith.subf %17, %8 : vector<8x128xf32>
    %cst_7 = arith.constant 0.918938517 : f32
    %19 = vector.broadcast %cst_7 : f32 to vector<8x128xf32>
    %20 = arith.addf %18, %19 : vector<8x128xf32>
    %cst_8 = arith.constant 1.000000e+00 : f32
    %21 = vector.broadcast %cst_8 : f32 to vector<8x128xf32>
    %22 = arith.cmpf ogt, %8, %21 : vector<8x128xf32>
    %cst_9 = arith.constant 0.000000e+00 : f32
    %23 = vector.broadcast %cst_9 : f32 to vector<8x128xf32>
    %24 = arith.select %22, %20, %23 : vector<8x128xi1>, vector<8x128xf32>
    %25 = arith.addf %14, %24 : vector<8x128xf32>
    %26 = math.log %5 : vector<8x128xf32>
    %cst_10 = arith.constant 5.000000e-01 : f32
    %27 = vector.broadcast %cst_10 : f32 to vector<8x128xf32>
    %28 = arith.mulf %27, %26 : vector<8x128xf32>
    %29 = arith.subf %25, %28 : vector<8x128xf32>
    %c0_11 = arith.constant 0 : index
    %c0_12 = arith.constant 0 : index
    %30 = vector.load %arg5[%c0_11, %c0_12] : memref<8x1xf32, #tpu.memory_space<vmem>>, vector<8x1xf32>
    %cst_13 = arith.constant dense<0.000000e+00> : vector<8xf32>
    %31 = vector.multi_reduction <add>, %29, %cst_13 [1] : vector<8x128xf32> to vector<8xf32>
    %32 = vector.shape_cast %31 : vector<8xf32> to vector<8x1xf32>
    %33 = arith.addf %30, %32 : vector<8x1xf32>
    %c0_14 = arith.constant 0 : index
    %c0_15 = arith.constant 0 : index
    %34 = vector.load %arg5[%c0_14, %c0_15] : memref<8x1xf32, #tpu.memory_space<vmem>>, vector<8x1xf32>
    tpu.vector_store %arg5[%c0_14, %c0_15], %33 {strides = array<i32>} : memref<8x1xf32, #tpu.memory_space<vmem>>, vector<8x1xf32>,
    %c0_i32_16 = arith.constant 0 : i32
    %35 = arith.cmpi eq, %arg1, %c0_i32_16 : i32
    %36 = arith.extui %35 : i1 to i32
    %c0_i32_17 = arith.constant 0 : i32
    %37 = arith.cmpi ne, %36, %c0_i32_17 : i32
    scf.if %37 {
      %c0_18 = arith.constant 0 : index
      %c0_19 = arith.constant 0 : index
      %38 = vector.load %arg5[%c0_18, %c0_19] : memref<8x1xf32, #tpu.memory_space<vmem>>, vector<8x1xf32>
      %cst_20 = arith.constant 7.812500e-03 : f32
      %39 = vector.broadcast %cst_20 : f32 to vector<8x1xf32>
      %40 = arith.mulf %38, %39 : vector<8x1xf32>
      %c0_21 = arith.constant 0 : index
      %c0_22 = arith.constant 0 : index
      %41 = vector.load %arg4[%c0_21, %c0_22] : memref<8x1xf32, #tpu.memory_space<vmem>>, vector<8x1xf32>
      tpu.vector_store %arg4[%c0_21, %c0_22], %40 {strides = array<i32>} : memref<8x1xf32, #tpu.memory_space<vmem>>, vector<8x1xf32>,
    } else {
    }
    return
  }
  func.func @transform_0(%arg0: i32, %arg1: i32) -> (i32, i32) {
    %c0_i32 = arith.constant 0 : i32
    return %arg0, %arg1 : i32, i32
  }
  func.func @transform_1(%arg0: i32, %arg1: i32) -> (i32, i32) {
    %c0_i32 = arith.constant 0 : i32
    return %arg0, %arg1 : i32, i32
  }
  func.func @transform_2(%arg0: i32, %arg1: i32) -> (i32, i32) {
    %c0_i32 = arith.constant 0 : i32
    %c0_i32_0 = arith.constant 0 : i32
    return %arg0, %c0_i32 : i32, i32
  }
}

</mosaic_0001>

<llo_original>
// kernel: tpu_custom_call.1
$region0: #{tpu_custom_call.1}
  #allocation0 [shape = 'u32[]', space=smem, size = 0x4, offset = 0x4, fixed_abs, tag = 'smem constant byte address 0x4 - core index']
  #allocation1 [shape = 'u32[144,128]{1,0:T(1,128)}', space=vmem, size = 0x12000, scoped, tag = 'internal scratch']
  #allocation2 [shape = 'f32[8,1]{1,0:T(8,128)}', space=vmem, size = 0x1000, scoped, tag = 'scratch operand']
  %s0 = inlined_call_operand.hbm [shape: f32[8,128], index: 0, kind: input, shape index: {}]
  %s1 = inlined_call_operand.hbm [shape: f32[8,128], index: 1, kind: input, shape index: {}]
  %s2 = inlined_call_operand.vmem [shape: f32[8,1], index: 2, kind: output, shape index: {}]
  %s3 = sld [smem:[#allocation0]]
  $region34: #{tpu_custom_call.1} parent=0
    _
  %s5 = ssub.s32 1, %s3
  %s6 = scalar_select 0, %s5, %s3
  $region1: #{tpu_custom_call.1} parent=0
    #allocation3 [shape = 'u8[4096]{0}', space=vmem, size = 0x1000, scoped, tag = 'input window, operand 0, single buffered']
    #allocation4 [shape = 's32[1]{0}', space=sflag, size = 0x4, scoped, tag = 'scoped memory for tpu_custom_call.1']
    #allocation5 [shape = 'u8[4096]{0}', space=vmem, size = 0x1000, scoped, tag = 'input window, operand 1, single buffered']
    #allocation6 [shape = 's32[1]{0}', space=sflag, size = 0x4, scoped, tag = 'scoped memory for tpu_custom_call.1']
    %7 = vsyncpa [#allocation4], 0
    %8 = vsyncpa [#allocation6], 0
    // Predicated region
    $region2: #{tpu_custom_call.1} parent=1 // pred_check
      _
    $region3: #{tpu_custom_call.1} parent=1 // pred_check_branch
      %10 = sbr.rel (0) target = $region5
    $region4: #{tpu_custom_call.1} parent=1 // pred_region
      %s12 = ssub.s32 128, 128
      %13 = vsyncadd [#allocation4], %s12
      %s15 = sshll.u32 [#allocation3], 4
      %s16 = int_to_ptr.vmem [resolvable:$true] %s15
      %18 = dma.hbm_to_vmem [thread:$0]  %s0, 128, %s16, [#allocation4]
    $region5: #{tpu_custom_call.1} parent=1 // pred_fallthru
      _
    // Predicated region
    $region6: #{tpu_custom_call.1} parent=1 // pred_check
      _
    $region7: #{tpu_custom_call.1} parent=1 // pred_check_branch
      %20 = sbr.rel (0) target = $region9
    $region8: #{tpu_custom_call.1} parent=1 // pred_region
      %s22 = ssub.s32 128, 128
      %23 = vsyncadd [#allocation6], %s22
      %s25 = sshll.u32 [#allocation5], 4
      %s26 = int_to_ptr.vmem [resolvable:$true] %s25
      %28 = dma.hbm_to_vmem [thread:$0]  %s1, 128, %s26, [#allocation6]
    $region9: #{tpu_custom_call.1} parent=1 // pred_fallthru
      _
    // Predicated region
    $region10: #{tpu_custom_call.1} parent=1 // pred_check
      _
    $region11: #{tpu_custom_call.1} parent=1 // pred_check_branch
      %30 = sbr.rel (0) target = $region13
    $region12: #{tpu_custom_call.1} parent=1 // pred_region
      %31 = dma.done [#allocation4], 128
    $region13: #{tpu_custom_call.1} parent=1 // pred_fallthru
      _
    // Predicated region
    $region14: #{tpu_custom_call.1} parent=1 // pred_check
      _
    $region15: #{tpu_custom_call.1} parent=1 // pred_check_branch
      %33 = sbr.rel (0) target = $region17
    $region16: #{tpu_custom_call.1} parent=1 // pred_region
      %34 = dma.done [#allocation6], 128
    $region17: #{tpu_custom_call.1} parent=1 // pred_fallthru
      _
    %p35 = scmp.eq.s32.totalorder 0, 0
    // Predicated region
    $region18: #{tpu_custom_call.1} parent=1 // pred_check
      %p36 = pneg %p35
    $region19: #{tpu_custom_call.1} parent=1 // pred_check_branch
      %38 = sbr.rel (%p36) target = $region21
    $region20: #{tpu_custom_call.1} parent=1 // pred_region
      %vm39 = vcmask 7168
      %40 = vst.msk [vmem:[#allocation2] sm:$0xff] %vm39, 0.0
    $region21: #{tpu_custom_call.1} parent=1 // pred_fallthru
      _
    %v41 = vld [vmem:[#allocation3] sm:$0xff]
    %v42 = vmax.f32 %v41, 0.01
    %v43 = vld [vmem:[#allocation5] sm:$0xff]
    %v44 = vmax.f32 %v43, 0.01
    %v45 = vlog2.pop %v44
    %v46 = vmul.f32 %v45, 0.6931472
    %v47 = vadd.f32 %v42, 1e-08
    %v48 = vlog2.pop %v47
    %v49 = vmul.f32 %v48, 0.6931472
    %v50 = vmul.f32 %v44, %v49
    %v51 = vsub.f32 %v42, %v50
    %v52 = vadd.f32 %v44, 0.5
    %v53 = vmul.f32 %v52, %v46
    %v54 = vsub.f32 %v53, %v44
    %v55 = vadd.f32 %v54, 0.9189385
    %vm56 = vcmp.gt.f32.partialorder %v44, 1.0
    %v57 = vsel %vm56, %v55, 0.0
    %v58 = vadd.f32 %v51, %v57
    %v59 = vlog2.pop %v42
    %v60 = vmul.f32 %v59, 0.6931472
    %v61 = vmul.f32 %v60, 0.5
    %v62 = vsub.f32 %v58, %v61
    %v63 = vld [vmem:[#allocation2] sm:$0xff]
    %64 = vadd.xlane.f32.xlu0 %v62
    %v65 = vpop.xlane.xlu0 %64
    %v66 = vadd.f32 %v63, %v65
    %vm67 = vcmask 7168
    %68 = vst.msk [vmem:[#allocation2] sm:$0xff] %vm67, %v66
    // Predicated region
    $region22: #{tpu_custom_call.1} parent=1 // pred_check
      %p69 = pneg %p35
    $region23: #{tpu_custom_call.1} parent=1 // pred_check_branch
      %71 = sbr.rel (%p69) target = $region25
    $region24: #{tpu_custom_call.1} parent=1 // pred_region
      %v72 = vld [vmem:[#allocation2] sm:$0xff]
      %v73 = vmul.f32 %v72, 0.0078125
      %74 = vst.msk [vmem:[%s2] sm:$0xff] %vm67, %v73
    $region25: #{tpu_custom_call.1} parent=1 // pred_fallthru
      _
    // Predicated region
    $region26: #{tpu_custom_call.1} parent=1 // pred_check
      _
    $region27: #{tpu_custom_call.1} parent=1 // pred_check_branch
      %76 = sbr.rel (0) target = $region29
    $region28: #{tpu_custom_call.1} parent=1 // pred_region
      _
    $region29: #{tpu_custom_call.1} parent=1 // pred_fallthru
      _
    // Predicated region
    $region30: #{tpu_custom_call.1} parent=1 // pred_check
      _
    $region31: #{tpu_custom_call.1} parent=1 // pred_check_branch
      %78 = sbr.rel (0) target = $region33
    $region32: #{tpu_custom_call.1} parent=1 // pred_region
      _
    $region33: #{tpu_custom_call.1} parent=1 // pred_fallthru
      _
    %79 = vsyncpa [#allocation4], 1
    %80 = vsyncpa [#allocation6], 1

</llo_original>
